<compile_context>
chip_gen: v7x
topology: tpu7x:2x2x1
jax: 0.10.0
libtpu: 0.0.40
codegen_flags: <defaults>
</compile_context>

<pallas_src>
import math
import functools

import jax
import jax.numpy as jnp
from jax import lax
from jax.experimental import pallas as pl
from jax.experimental.pallas import tpu as pltpu


def _cross_attn_kernel(x1_ref, x2_ref, w_ref, o_ref, *, num_heads, head_dim):
    # One grid step == one block of `Bb` batch elements, folded into rows.
    Bb, N, Cp = x1_ref.shape           # Cp = lane-padded channel count
    M = x2_ref.shape[1]
    H = num_heads
    Dh = head_dim
    C = H * Dh                         # real channel count (<= Cp)
    x_dtype = x1_ref.dtype

    # Fold batch into matmul rows (sublane-filling, no relayout: N % 8 == 0).
    x1 = x1_ref[...].reshape(Bb * N, Cp)        # (Bb*N, Cp)
    x2 = x2_ref[...].reshape(Bb * M, Cp)        # (Bb*M, Cp)

    # Packed weight slab: [ Wq^T*scale | Wk^T | Wv^T | Wo^T ], lane-aligned.
    wq_t = w_ref[:, 0 * Cp:1 * Cp]              # (Cp, Cp)
    wkv_t = w_ref[:, 1 * Cp:3 * Cp]             # (Cp, 2Cp) fused K/V projection
    wo_t = w_ref[:, 3 * Cp:4 * Cp]              # (Cp, Cp)

    # Input projections (MXU, f32 accumulation). K and V share one matmul.
    q = jnp.dot(x1, wq_t, preferred_element_type=jnp.float32)   # (Bb*N, Cp)
    kv = jnp.dot(x2, wkv_t, preferred_element_type=jnp.float32)  # (Bb*M, 2Cp)
    k = kv[:, :Cp]                                               # (Bb*M, Cp)
    v = kv[:, Cp:]                                               # (Bb*M, Cp)

    # Constant per-head segment matrices (0/1), built from 2-D iotas — no
    # integer division, no transposes.  seg_sum[c, h] = seg_exp[h, c] =
    # 1 iff channel c belongs to head h (padded channels map to nothing).
    c_i = lax.broadcasted_iota(jnp.int32, (Cp, H), 0)
    h_i = lax.broadcasted_iota(jnp.int32, (Cp, H), 1)
    seg_sum = ((c_i >= h_i * Dh) & (c_i < (h_i + 1) * Dh)).astype(jnp.float32)
    h_j = lax.broadcasted_iota(jnp.int32, (H, Cp), 0)
    c_j = lax.broadcasted_iota(jnp.int32, (H, Cp), 1)
    seg_exp = ((c_j >= h_j * Dh) & (c_j < (h_j + 1) * Dh)).astype(jnp.float32)

    # --- Scores: VPU outer product + one segment-sum matmul; heads on lanes.
    q3 = q.reshape(Bb, N, Cp)
    k3 = k.reshape(Bb, M, Cp)
    v3 = v.reshape(Bb, M, Cp)
    qk = q3[:, :, None, :] * k3[:, None, :, :]                   # (Bb,N,M,Cp)
    s = jnp.dot(qk.reshape(Bb * N * M, Cp), seg_sum,
                preferred_element_type=jnp.float32)              # (Bb*N*M, H)
    s = s.reshape(Bb, N, M, H)

    # --- Numerically-stable softmax over the key axis (f32 statistics);
    #     reciprocal on the EUP, multiply on the VPU.
    s = s - jnp.max(s, axis=2, keepdims=True)
    p = jnp.exp(s)
    p = p * pl.reciprocal(jnp.sum(p, axis=2, keepdims=True), approx=True)

    # --- Weighted values: expand head probs back onto the C lanes (tiny MXU
    #     matmul), multiply with V on the VPU, reduce over the key axis.
    pe = jnp.dot(p.reshape(Bb * N * M, H), seg_exp,
                 preferred_element_type=jnp.float32)             # (Bb*N*M, Cp)
    pe = pe.reshape(Bb, N, M, Cp)
    ctx = jnp.sum(pe * v3[:, None, :, :], axis=2)                # (Bb, N, Cp)

    # Output projection (MXU) and lane-dense (Cp = k*128) store.
    out = jnp.dot(ctx.reshape(Bb * N, Cp).astype(x_dtype), wo_t,
                  preferred_element_type=jnp.float32)            # (Bb*N, Cp)
    o_ref[...] = out.reshape(Bb, N, Cp).astype(o_ref.dtype)


def cross_attention(x1, x2, in_proj_weight, out_proj_weight, *,
                    num_heads, block_b=None):
    """x1: (B, N, C) queries; x2: (B, M, C) keys/values (batch_first)."""
    B, N, C = x1.shape
    _, M, _ = x2.shape
    assert C % num_heads == 0
    head_dim = C // num_heads
    scale = 1.0 / math.sqrt(head_dim)

    # Lane-dense padding of the channel axis to a full 128-lane tile.
    # No-op when C is already a multiple of 128.
    LANES = 128
    Cp = max(LANES, ((C + LANES - 1) // LANES) * LANES)

    # Slice the packed in_proj weight (PyTorch convention: y = x @ W^T).
    wq = in_proj_weight[0 * C:1 * C]
    wk = in_proj_weight[1 * C:2 * C]
    wv = in_proj_weight[2 * C:3 * C]

    def prep(w, pre_scale=1.0):
        # Hoisted transpose (+ optional softmax-scale fold), zero-padded to Cp.
        wt = (w * jnp.asarray(pre_scale, w.dtype)).T             # (C, C)
        return jnp.pad(wt, ((0, Cp - C), (0, Cp - C)))

    # Single packed, lane-aligned weight slab -> one input DMA per step.
    w_packed = jnp.concatenate(
        [prep(wq, scale), prep(wk), prep(wv), prep(out_proj_weight)],
        axis=1).astype(x1.dtype)                                 # (Cp, 4*Cp)

    x1p = jnp.pad(x1, ((0, 0), (0, 0), (0, Cp - C)))
    x2p = jnp.pad(x2, ((0, 0), (0, 0), (0, Cp - C)))

    # Batch blocking: fold batches into matmul rows while keeping >= 2 grid
    # steps when B >= 2 (both v7x TensorCores busy).
    if block_b is None:
        block_b = max(1, B // 2)
    while B % block_b:
        block_b -= 1
    nb = B // block_b

    kernel = functools.partial(_cross_attn_kernel,
                               num_heads=num_heads, head_dim=head_dim)

    out_p = pl.pallas_call(
        kernel,
        out_shape=jax.ShapeDtypeStruct((B, N, Cp), x1.dtype),
        grid_spec=pltpu.PrefetchScalarGridSpec(
            num_scalar_prefetch=0,
            grid=(nb,),
            in_specs=[
                pl.BlockSpec((block_b, N, Cp), lambda b: (b, 0, 0)),   # x1
                pl.BlockSpec((block_b, M, Cp), lambda b: (b, 0, 0)),   # x2
                pl.BlockSpec((Cp, 4 * Cp), lambda b: (0, 0)),          # weights
            ],
            out_specs=pl.BlockSpec((block_b, N, Cp), lambda b: (b, 0, 0)),
        ),
        compiler_params=pltpu.CompilerParams(
            dimension_semantics=("parallel",),
            vmem_limit_bytes=32 * 1024 * 1024),
    )(x1p, x2p, w_packed)

    return out_p[:, :, :C]


def _xavier_uniform(key, shape, dtype=jnp.float32):
    fan_out, fan_in = shape
    bound = math.sqrt(6.0 / (fan_in + fan_out))
    return jax.random.uniform(key, shape, dtype, minval=-bound, maxval=bound)


def _reference(x1, x2, in_proj_weight, out_proj_weight, num_heads):
    """Pure-JAX reference mirroring torch.nn.MultiheadAttention (eval)."""
    B, N, C = x1.shape
    M = x2.shape[1]
    Dh = C // num_heads
    wq, wk, wv = jnp.split(in_proj_weight, 3, axis=0)
    q = (x1 @ wq.T).reshape(B, N, num_heads, Dh).transpose(0, 2, 1, 3)
    k = (x2 @ wk.T).reshape(B, M, num_heads, Dh).transpose(0, 2, 1, 3)
    v = (x2 @ wv.T).reshape(B, M, num_heads, Dh).transpose(0, 2, 1, 3)
    s = jnp.einsum("bhnd,bhmd->bhnm", q, k) / math.sqrt(Dh)
    p = jax.nn.softmax(s, axis=-1)
    o = jnp.einsum("bhnm,bhmd->bhnd", p, v)
    o = o.transpose(0, 2, 1, 3).reshape(B, N, C)
    return o @ out_proj_weight.T


if __name__ == "__main__":
    B, N, M, C, H = 2, 8, 8, 32, 8

    key = jax.random.PRNGKey(0)
    k_x1, k_x2, k_in, k_out = jax.random.split(key, 4)

    x1 = jax.random.normal(k_x1, (B, N, C), jnp.float32)
    x2 = jax.random.normal(k_x2, (B, M, C), jnp.float32)

    # Deterministic parameter init matching the module's _reset_parameters:
    # xavier_uniform on in_proj_weight (3C, C) and out_proj.weight (C, C);
    # no biases (qkv_bias=False).
    in_proj_weight = _xavier_uniform(k_in, (3 * C, C))
    out_proj_weight = _xavier_uniform(k_out, (C, C))

    out = cross_attention(x1, x2, in_proj_weight, out_proj_weight, num_heads=H)
    out = jax.block_until_ready(out)

    ref = _reference(x1, x2, in_proj_weight, out_proj_weight, H)
    assert out.shape == (B, N, C)
    # Tolerance accounts for the EUP approximate reciprocal in the softmax
    # normalization; structural errors (wrong head segmentation / scale /
    # projection) would show up as O(0.1-1) errors.
    max_err = float(jnp.max(jnp.abs(out - ref)))
    assert max_err < 1e-2, f"mismatch vs reference: max |err| = {max_err}"

    print("KERNEL_OK")
</pallas_src>

<mosaic_0001>
module attributes {stable_mosaic.version = 11 : i64} {
  func.func @_cross_attn_kernel(%arg0: i32, %arg1: memref<1x8x128xf32, #tpu.memory_space<vmem>>, %arg2: memref<1x8x128xf32, #tpu.memory_space<vmem>>, %arg3: memref<128x512xf32, #tpu.memory_space<vmem>>, %arg4: memref<1x8x128xf32, #tpu.memory_space<vmem>>) attributes {dimension_semantics = [#tpu.dimension_semantics<parallel>], iteration_bounds = array<i64: 2>, scalar_prefetch = 0 : i64, scratch_operands = 0 : i64, tpu.core_type = #tpu.core_type<tc>, window_params = [{transform_indices = @transform_0, window_bounds = array<i64: 1, 8, 128>}, {transform_indices = @transform_1, window_bounds = array<i64: 1, 8, 128>}, {pipeline_mode = #tpu.pipeline_mode<synchronous>, transform_indices = @transform_2, window_bounds = array<i64: 128, 512>}, {transform_indices = @transform_3, window_bounds = array<i64: 1, 8, 128>}]} {
    %c0 = arith.constant 0 : index
    %c0_0 = arith.constant 0 : index
    %c0_1 = arith.constant 0 : index
    %0 = vector.load %arg1[%c0, %c0_0, %c0_1] : memref<1x8x128xf32, #tpu.memory_space<vmem>>, vector<1x8x128xf32>
    %1 = vector.shape_cast %0 : vector<1x8x128xf32> to vector<8x128xf32>
    %c0_2 = arith.constant 0 : index
    %c0_3 = arith.constant 0 : index
    %c0_4 = arith.constant 0 : index
    %2 = vector.load %arg2[%c0_2, %c0_3, %c0_4] : memref<1x8x128xf32, #tpu.memory_space<vmem>>, vector<1x8x128xf32>
    %3 = vector.shape_cast %2 : vector<1x8x128xf32> to vector<8x128xf32>
    %c0_5 = arith.constant 0 : index
    %c0_6 = arith.constant 0 : index
    %4 = vector.load %arg3[%c0_5, %c0_6] : memref<128x512xf32, #tpu.memory_space<vmem>>, vector<128x128xf32>
    %c0_7 = arith.constant 0 : index
    %c128 = arith.constant 128 : index
    %5 = vector.load %arg3[%c0_7, %c128] : memref<128x512xf32, #tpu.memory_space<vmem>>, vector<128x256xf32>
    %c0_8 = arith.constant 0 : index
    %c384 = arith.constant 384 : index
    %6 = vector.load %arg3[%c0_8, %c384] : memref<128x512xf32, #tpu.memory_space<vmem>>, vector<128x128xf32>
    %cst = arith.constant dense<0.000000e+00> : vector<8x128xf32>
    %7 = tpu.matmul %1, %4, %cst {dimension_numbers = #tpu.dot_dimension_numbers<[1], [0], [0], [1], [0, 0, 1, 1], [], []>} : vector<8x128xf32>, vector<128x128xf32>, vector<8x128xf32> -> vector<8x128xf32>
    %cst_9 = arith.constant dense<0.000000e+00> : vector<8x256xf32>
    %8 = tpu.matmul %3, %5, %cst_9 {dimension_numbers = #tpu.dot_dimension_numbers<[1], [0], [0], [1], [0, 0, 1, 1], [], []>} : vector<8x128xf32>, vector<128x256xf32>, vector<8x256xf32> -> vector<8x256xf32>
    %9 = vector.extract_strided_slice %8 {offsets = [0, 0], sizes = [8, 128], strides = [1, 1]} : vector<8x256xf32> to vector<8x128xf32>
    %10 = vector.extract_strided_slice %8 {offsets = [0, 128], sizes = [8, 128], strides = [1, 1]} : vector<8x256xf32> to vector<8x128xf32>
    %11 = tpu.iota {dimensions = array<i32: 0>} : vector<128x8xi32>
    %12 = tpu.iota {dimensions = array<i32: 1>} : vector<128x8xi32>
    %c4_i32 = arith.constant 4 : i32
    %13 = vector.broadcast %c4_i32 : i32 to vector<128x8xi32>
    %14 = arith.muli %12, %13 : vector<128x8xi32>
    %15 = arith.cmpi sge, %11, %14 : vector<128x8xi32>
    %c1_i32 = arith.constant 1 : i32
    %16 = vector.broadcast %c1_i32 : i32 to vector<128x8xi32>
    %17 = arith.addi %12, %16 : vector<128x8xi32>
    %c4_i32_10 = arith.constant 4 : i32
    %18 = vector.broadcast %c4_i32_10 : i32 to vector<128x8xi32>
    %19 = arith.muli %17, %18 : vector<128x8xi32>
    %20 = arith.cmpi slt, %11, %19 : vector<128x8xi32>
    %21 = arith.andi %15, %20 : vector<128x8xi1>
    %22 = arith.extui %21 : vector<128x8xi1> to vector<128x8xi32>
    %23 = arith.sitofp %22 : vector<128x8xi32> to vector<128x8xf32>
    %24 = tpu.iota {dimensions = array<i32: 0>} : vector<8x128xi32>
    %25 = tpu.iota {dimensions = array<i32: 1>} : vector<8x128xi32>
    %c4_i32_11 = arith.constant 4 : i32
    %26 = vector.broadcast %c4_i32_11 : i32 to vector<8x128xi32>
    %27 = arith.muli %24, %26 : vector<8x128xi32>
    %28 = arith.cmpi sge, %25, %27 : vector<8x128xi32>
    %c1_i32_12 = arith.constant 1 : i32
    %29 = vector.broadcast %c1_i32_12 : i32 to vector<8x128xi32>
    %30 = arith.addi %24, %29 : vector<8x128xi32>
    %c4_i32_13 = arith.constant 4 : i32
    %31 = vector.broadcast %c4_i32_13 : i32 to vector<8x128xi32>
    %32 = arith.muli %30, %31 : vector<8x128xi32>
    %33 = arith.cmpi slt, %25, %32 : vector<8x128xi32>
    %34 = arith.andi %28, %33 : vector<8x128xi1>
    %35 = arith.extui %34 : vector<8x128xi1> to vector<8x128xi32>
    %36 = arith.sitofp %35 : vector<8x128xi32> to vector<8x128xf32>
    %37 = vector.shape_cast %7 : vector<8x128xf32> to vector<1x8x128xf32>
    %38 = vector.shape_cast %9 : vector<8x128xf32> to vector<1x8x128xf32>
    %39 = vector.shape_cast %10 : vector<8x128xf32> to vector<1x8x128xf32>
    %40 = vector.shape_cast %37 : vector<1x8x128xf32> to vector<1x8x1x128xf32>
    %41 = vector.shape_cast %38 : vector<1x8x128xf32> to vector<1x1x8x128xf32>
    %42 = vector.broadcast %40 : vector<1x8x1x128xf32> to vector<1x8x8x128xf32>
    %43 = vector.broadcast %41 : vector<1x1x8x128xf32> to vector<1x8x8x128xf32>
    %44 = arith.mulf %42, %43 : vector<1x8x8x128xf32>
    %45 = vector.shape_cast %44 : vector<1x8x8x128xf32> to vector<64x128xf32>
    %cst_14 = arith.constant dense<0.000000e+00> : vector<64x8xf32>
    %46 = tpu.matmul %45, %23, %cst_14 {dimension_numbers = #tpu.dot_dimension_numbers<[1], [0], [0], [1], [0, 0, 1, 1], [], []>} : vector<64x128xf32>, vector<128x8xf32>, vector<64x8xf32> -> vector<64x8xf32>
    %47 = vector.shape_cast %46 : vector<64x8xf32> to vector<1x8x8x8xf32>
    %cst_15 = arith.constant dense<0xFF800000> : vector<1x8x8xf32>
    %48 = vector.multi_reduction <maximumf>, %47, %cst_15 [2] : vector<1x8x8x8xf32> to vector<1x8x8xf32>
    %49 = vector.shape_cast %48 : vector<1x8x8xf32> to vector<1x8x1x8xf32>
    %50 = vector.broadcast %49 : vector<1x8x1x8xf32> to vector<1x8x8x8xf32>
    %51 = arith.subf %47, %50 : vector<1x8x8x8xf32>
    %52 = math.exp %51 : vector<1x8x8x8xf32>
    %cst_16 = arith.constant dense<0.000000e+00> : vector<1x8x8xf32>
    %53 = vector.multi_reduction <add>, %52, %cst_16 [2] : vector<1x8x8x8xf32> to vector<1x8x8xf32>
    %54 = vector.shape_cast %53 : vector<1x8x8xf32> to vector<1x8x1x8xf32>
    %55 = tpu.reciprocal %54 {approx = true} : vector<1x8x1x8xf32> -> vector<1x8x1x8xf32>
    %56 = vector.broadcast %55 : vector<1x8x1x8xf32> to vector<1x8x8x8xf32>
    %57 = arith.mulf %52, %56 : vector<1x8x8x8xf32>
    %58 = vector.shape_cast %57 : vector<1x8x8x8xf32> to vector<64x8xf32>
    %cst_17 = arith.constant dense<0.000000e+00> : vector<64x128xf32>
    %59 = tpu.matmul %58, %36, %cst_17 {dimension_numbers = #tpu.dot_dimension_numbers<[1], [0], [0], [1], [0, 0, 1, 1], [], []>} : vector<64x8xf32>, vector<8x128xf32>, vector<64x128xf32> -> vector<64x128xf32>
    %60 = vector.shape_cast %59 : vector<64x128xf32> to vector<1x8x8x128xf32>
    %61 = vector.shape_cast %39 : vector<1x8x128xf32> to vector<1x1x8x128xf32>
    %62 = vector.broadcast %61 : vector<1x1x8x128xf32> to vector<1x8x8x128xf32>
    %63 = arith.mulf %60, %62 : vector<1x8x8x128xf32>
    %cst_18 = arith.constant dense<0.000000e+00> : vector<1x8x128xf32>
    %64 = vector.multi_reduction <add>, %63, %cst_18 [2] : vector<1x8x8x128xf32> to vector<1x8x128xf32>
    %65 = vector.shape_cast %64 : vector<1x8x128xf32> to vector<8x128xf32>
    %cst_19 = arith.constant dense<0.000000e+00> : vector<8x128xf32>
    %66 = tpu.matmul %65, %6, %cst_19 {dimension_numbers = #tpu.dot_dimension_numbers<[1], [0], [0], [1], [0, 0, 1, 1], [], []>} : vector<8x128xf32>, vector<128x128xf32>, vector<8x128xf32> -> vector<8x128xf32>
    %67 = vector.shape_cast %66 : vector<8x128xf32> to vector<1x8x128xf32>
    %c0_20 = arith.constant 0 : index
    %c0_21 = arith.constant 0 : index
    %c0_22 = arith.constant 0 : index
    %68 = vector.load %arg4[%c0_20, %c0_21, %c0_22] : memref<1x8x128xf32, #tpu.memory_space<vmem>>, vector<1x8x128xf32>
    tpu.vector_store %arg4[%c0_20, %c0_21, %c0_22], %67 {strides = array<i32>} : memref<1x8x128xf32, #tpu.memory_space<vmem>>, vector<1x8x128xf32>,
    return
  }
  func.func @transform_0(%arg0: i32) -> (i32, i32, i32) {
    %c0_i32 = arith.constant 0 : i32
    %c0_i32_0 = arith.constant 0 : i32
    %c0_i32_1 = arith.constant 0 : i32
    return %arg0, %c0_i32, %c0_i32_0 : i32, i32, i32
  }
  func.func @transform_1(%arg0: i32) -> (i32, i32, i32) {
    %c0_i32 = arith.constant 0 : i32
    %c0_i32_0 = arith.constant 0 : i32
    %c0_i32_1 = arith.constant 0 : i32
    return %arg0, %c0_i32, %c0_i32_0 : i32, i32, i32
  }
  func.func @transform_2(%arg0: i32) -> (i32, i32) {
    %c0_i32 = arith.constant 0 : i32
    %c0_i32_0 = arith.constant 0 : i32
    %c0_i32_1 = arith.constant 0 : i32
    return %c0_i32, %c0_i32_0 : i32, i32
  }
  func.func @transform_3(%arg0: i32) -> (i32, i32, i32) {
    %c0_i32 = arith.constant 0 : i32
    %c0_i32_0 = arith.constant 0 : i32
    %c0_i32_1 = arith.constant 0 : i32
    return %arg0, %c0_i32, %c0_i32_0 : i32, i32, i32
  }
}

</mosaic_0001>

<llo_original>
// kernel: tpu_custom_call.1
$region0: #{tpu_custom_call.1}
  #allocation0 [shape = 'u32[]', space=smem, size = 0x4, offset = 0x4, fixed_abs, tag = 'smem constant byte address 0x4 - core index']
  #allocation1 [shape = 'u32[144,128]{1,0:T(1,128)}', space=vmem, size = 0x12000, scoped, tag = 'internal scratch']
  %s0 = inlined_call_operand.hbm [shape: f32[2,8,128], index: 0, kind: input, shape index: {}]
  %s1 = inlined_call_operand.hbm [shape: f32[2,8,128], index: 1, kind: input, shape index: {}]
  %s2 = inlined_call_operand.hbm [shape: f32[128,512], index: 2, kind: input, shape index: {}]
  %s3 = inlined_call_operand.hbm [shape: f32[2,8,128], index: 3, kind: output, shape index: {}]
  %s4 = sld [smem:[#allocation0]]
  $region57: #{tpu_custom_call.1} parent=0
    _
  %s6 = ssub.s32 1, %s4
  %s7 = scalar_select 0, %s6, %s4
  $region1: #{tpu_custom_call.1} parent=0
    #allocation2 [shape = 'u8[8192]{0}', space=vmem, size = 0x2000, scoped, tag = 'input window, operand 0']
    #allocation3 [shape = 's32[2]{0}', space=sflag, size = 0x8, scoped, tag = 'scoped memory for tpu_custom_call.1']
    #allocation4 [shape = 's32[2]{0}', space=sflag, size = 0x8, scoped, tag = 'scoped memory for tpu_custom_call.1']
    #allocation5 [shape = 'u8[8192]{0}', space=vmem, size = 0x2000, scoped, tag = 'input window, operand 1']
    #allocation6 [shape = 's32[2]{0}', space=sflag, size = 0x8, scoped, tag = 'scoped memory for tpu_custom_call.1']
    #allocation7 [shape = 'u8[262144]{0}', space=vmem, size = 0x40000, scoped, tag = 'input window, operand 2, single buffered']
    #allocation8 [shape = 'u8[8192]{0}', space=vmem, size = 0x2000, scoped, tag = 'output window, operand 0']
    %8 = vsyncpa [#allocation3], 0
    %s9 = scalar_lea.sflag [#allocation3], 1
    %10 = vsyncpa %s9, 0
    %11 = vsyncpa [#allocation6], 0
    %s12 = scalar_lea.sflag [#allocation6], 1
    %13 = vsyncpa %s12, 0
    %14 = vsyncpa [#allocation4], 0
    %s15 = scalar_lea.sflag [#allocation4], 1
    %16 = vsyncpa %s15, 0
    loop: start=0, step=1, limit=4
    $region2: #{tpu_custom_call.1} parent=1 // loop_pre_header
      _
    $region3: #{tpu_custom_call.1} parent=1 // loop_header
      %s18 = sphi 0, %s22
      %p19 = scmp.ge.s32.totalorder %s18, 4
      %s28 = sphi 0, %s30
      %s31 = sphi 0, %s28
      %s32 = sphi 0, %s31
      %s48 = sphi 0, %s32
      %s54 = sphi 0, %s56
      %s57 = sphi 0, %s54
      %s58 = sphi 0, %s57
      %s74 = sphi 0, %s58
      %s78 = sphi 0, %s78
      %s80 = sphi 0, %s78
      %s81 = sphi 0, %s80
      %s95 = sphi 0, %s81
      %s101 = sphi 0, %s103
      %s104 = sphi 0, %s101
      %s105 = sphi 0, %s104
      %s121 = sphi 0, %s105
    $region4: #{tpu_custom_call.1} parent=1 // loop_header_branch
      %21 = sbr.rel (%p19) target = $region8
    $region5: #{tpu_custom_call.1} parent=1 // loop_body
      %s23 = ssub.s32 %s18, 1
      %s24 = ssub.s32 %s18, 2
      %s25 = sadd.s32 %s18, 1
      %s26 = ssub.s32 %s18, %s25
      %p27 = scmp.eq.s32.totalorder %s26, 0
      %s29 = sadd.s32 %s28, 1
      %s30 = scalar_select %p27, %s28, %s29
      %p33 = pneg %p27
      %p34 = scmp.eq.s32.totalorder %s18, 1
      %p35 = por %p33, %p34
      %p36 = scmp.ne.s32.totalorder %s28, %s31
      %p37 = scmp.eq.s32.totalorder %s18, 0
      %p38 = por %p36, %p37
      %p39 = scmp.ne.s32.totalorder %s28, %s31
      %p40 = scmp.eq.s32.totalorder %s23, 1
      %p41 = por %p39, %p40
      %p42 = scmp.ne.s32.totalorder %s31, %s32
      %p43 = scmp.eq.s32.totalorder %s23, 0
      %p44 = por %p42, %p43
      %p45 = scmp.ne.s32.totalorder %s31, %s32
      %p46 = scmp.eq.s32.totalorder %s24, 1
      %p47 = por %p45, %p46
      %p49 = scmp.ne.s32.totalorder %s32, %s48
      %p50 = scmp.eq.s32.totalorder %s24, 0
      %p51 = por %p49, %p50
      %s52 = ssub.s32 %s18, %s25
      %p53 = scmp.eq.s32.totalorder %s52, 0
      %s55 = sadd.s32 %s54, 1
      %s56 = scalar_select %p53, %s54, %s55
      %p59 = pneg %p53
      %p60 = scmp.eq.s32.totalorder %s18, 1
      %p61 = por %p59, %p60
      %p62 = scmp.ne.s32.totalorder %s54, %s57
      %p63 = scmp.eq.s32.totalorder %s18, 0
      %p64 = por %p62, %p63
      %p65 = scmp.ne.s32.totalorder %s54, %s57
      %p66 = scmp.eq.s32.totalorder %s23, 1
      %p67 = por %p65, %p66
      %p68 = scmp.ne.s32.totalorder %s57, %s58
      %p69 = scmp.eq.s32.totalorder %s23, 0
      %p70 = por %p68, %p69
      %p71 = scmp.ne.s32.totalorder %s57, %s58
      %p72 = scmp.eq.s32.totalorder %s24, 1
      %p73 = por %p71, %p72
      %p75 = scmp.ne.s32.totalorder %s58, %s74
      %p76 = scmp.eq.s32.totalorder %s24, 0
      %p77 = por %p75, %p76
      %s79 = sadd.s32 %s78, 1
      %p82 = scmp.eq.s32.totalorder %s18, 1
      %p83 = scmp.ne.s32.totalorder %s78, %s80
      %p84 = scmp.eq.s32.totalorder %s18, 0
      %p85 = por %p83, %p84
      %p86 = scmp.ne.s32.totalorder %s78, %s80
      %p87 = scmp.eq.s32.totalorder %s23, 1
      %p88 = por %p86, %p87
      %p89 = scmp.ne.s32.totalorder %s80, %s81
      %p90 = scmp.eq.s32.totalorder %s23, 0
      %p91 = por %p89, %p90
      %p92 = scmp.ne.s32.totalorder %s80, %s81
      %p93 = scmp.eq.s32.totalorder %s24, 1
      %p94 = por %p92, %p93
      %p96 = scmp.ne.s32.totalorder %s81, %s95
      %p97 = scmp.eq.s32.totalorder %s24, 0
      %p98 = por %p96, %p97
      %s99 = ssub.s32 %s18, %s25
      %p100 = scmp.eq.s32.totalorder %s99, 0
      %s102 = sadd.s32 %s101, 1
      %s103 = scalar_select %p100, %s101, %s102
      %p106 = pneg %p100
      %p107 = scmp.eq.s32.totalorder %s18, 1
      %p108 = por %p106, %p107
      %p109 = scmp.ne.s32.totalorder %s101, %s104
      %p110 = scmp.eq.s32.totalorder %s18, 0
      %p111 = por %p109, %p110
      %p112 = scmp.ne.s32.totalorder %s101, %s104
      %p113 = scmp.eq.s32.totalorder %s23, 1
      %p114 = por %p112, %p113
      %p115 = scmp.ne.s32.totalorder %s104, %s105
      %p116 = scmp.eq.s32.totalorder %s23, 0
      %p117 = por %p115, %p116
      %p118 = scmp.ne.s32.totalorder %s104, %s105
      %p119 = scmp.eq.s32.totalorder %s24, 1
      %p120 = por %p118, %p119
      %p122 = scmp.ne.s32.totalorder %s105, %s121
      %p123 = scmp.eq.s32.totalorder %s24, 0
      %p124 = por %p122, %p123
      %p125 = scmp.le.s32.totalorder 1, %s18
      %p126 = scmp.lt.s32.totalorder %s18, 3
      %p127 = pnand %p125, %p126
      %p128 = pneg %p127
      // Predicated region
      $region9: #{tpu_custom_call.1} parent=5 // pred_check
        _
      $region10: #{tpu_custom_call.1} parent=5 // pred_check_branch
        %130 = sbr.rel (%p127) target = $region12
      $region11: #{tpu_custom_call.1} parent=5 // pred_region
        %s131 = ssub.s32 %s18, 1
        // Predicated region
        $region13: #{tpu_custom_call.1} parent=11 // pred_check
          %p132 = pneg %p91
        $region14: #{tpu_custom_call.1} parent=11 // pred_check_branch
          %134 = sbr.rel (%p132) target = $region16
        $region15: #{tpu_custom_call.1} parent=11 // pred_region
          %s136 = ssub.s32 8192, 8192
          %137 = vsyncadd [#allocation6], %s136
          %s138 = sshll.u32 [#allocation7], 4
          %s139 = int_to_ptr.vmem [resolvable:$true] %s138
          %144 = dma.hbm_to_vmem [thread:$0]  %s2, 8192, %s139, [#allocation6], 512, 512, 32
        $region16: #{tpu_custom_call.1} parent=11 // pred_fallthru
          _
      $region12: #{tpu_custom_call.1} parent=5 // pred_fallthru
        _
      %p145 = scmp.lt.s32.totalorder %s18, 2
      // Predicated region
      $region17: #{tpu_custom_call.1} parent=5 // pred_check
        %p146 = pneg %p145
      $region18: #{tpu_custom_call.1} parent=5 // pred_check_branch
        %148 = sbr.rel (%p146) target = $region20
      $region19: #{tpu_custom_call.1} parent=5 // pred_region
        // Predicated region
        $region21: #{tpu_custom_call.1} parent=19 // pred_check
          %p149 = pneg %p38
        $region22: #{tpu_custom_call.1} parent=19 // pred_check_branch
          %151 = sbr.rel (%p149) target = $region24
        $region23: #{tpu_custom_call.1} parent=19 // pred_region
          %s152 = sand.u32 %s28, 1
          %s153 = scalar_lea.sflag [#allocation3], %s152
          %s154 = sand.u32 %s28, 1
          %s155 = smul.addr %s154, 8
          %s156 = scalar_lea.vmem [#allocation2], %s155
          %s158 = ssub.s32 128, 128
          %159 = vsyncadd %s153, %s158
          %s160 = smul.addr %s18, 128
          %s161 = scalar_lea.hbm %s0, %s160
          %s163 = sshll.u32 %s156, 4
          %s164 = int_to_ptr.vmem [resolvable:$true] %s163
          %166 = dma.hbm_to_vmem [thread:$0]  %s161, 128, %s164, %s153
        $region24: #{tpu_custom_call.1} parent=19 // pred_fallthru
          _
        // Predicated region
        $region25: #{tpu_custom_call.1} parent=19 // pred_check
          %p167 = pneg %p64
        $region26: #{tpu_custom_call.1} parent=19 // pred_check_branch
          %169 = sbr.rel (%p167) target = $region28
        $region27: #{tpu_custom_call.1} parent=19 // pred_region
          %s170 = sand.u32 %s18, 1
          %s171 = scalar_lea.sflag [#allocation6], %s170
          %s172 = sand.u32 %s54, 1
          %s173 = smul.addr %s172, 8
          %s174 = scalar_lea.vmem [#allocation5], %s173
          %s176 = ssub.s32 128, 128
          %177 = vsyncadd %s171, %s176
          %s178 = smul.addr %s18, 128
          %s179 = scalar_lea.hbm %s1, %s178
          %s181 = sshll.u32 %s174, 4
          %s182 = int_to_ptr.vmem [resolvable:$true] %s181
          %184 = dma.hbm_to_vmem [thread:$0]  %s179, 128, %s182, %s171
        $region28: #{tpu_custom_call.1} parent=19 // pred_fallthru
          _
      $region20: #{tpu_custom_call.1} parent=5 // pred_fallthru
        _
      %p185 = scmp.le.s32.totalorder 1, %s18
      %p186 = scmp.lt.s32.totalorder %s18, 3
      %p187 = pnand %p185, %p186
      %p188 = pneg %p187
      // Predicated region
      $region29: #{tpu_custom_call.1} parent=5 // pred_check
        _
      $region30: #{tpu_custom_call.1} parent=5 // pred_check_branch
        %190 = sbr.rel (%p187) target = $region32
      $region31: #{tpu_custom_call.1} parent=5 // pred_region
        %s191 = ssub.s32 %s18, 1
        %s192 = sand.u32 %s31, 1
        %s193 = scalar_lea.sflag [#allocation3], %s192
        %s194 = sand.u32 %s31, 1
        %s195 = smul.addr %s194, 8
        %s196 = scalar_lea.vmem [#allocation2], %s195
        // Predicated region
        $region33: #{tpu_custom_call.1} parent=31 // pred_check
          %p197 = pneg %p44
        $region34: #{tpu_custom_call.1} parent=31 // pred_check_branch
          %199 = sbr.rel (%p197) target = $region36
        $region35: #{tpu_custom_call.1} parent=31 // pred_region
          %200 = dma.done %s193, 128
        $region36: #{tpu_custom_call.1} parent=31 // pred_fallthru
          _
        %s201 = sand.u32 %s23, 1
        %s202 = scalar_lea.sflag [#allocation6], %s201
        %s203 = sand.u32 %s57, 1
        %s204 = smul.addr %s203, 8
        %s205 = scalar_lea.vmem [#allocation5], %s204
        // Predicated region
        $region37: #{tpu_custom_call.1} parent=31 // pred_check
          %p206 = pneg %p70
        $region38: #{tpu_custom_call.1} parent=31 // pred_check_branch
          %208 = sbr.rel (%p206) target = $region40
        $region39: #{tpu_custom_call.1} parent=31 // pred_region
          %209 = dma.done %s202, 128
        $region40: #{tpu_custom_call.1} parent=31 // pred_fallthru
          _
        // Predicated region
        $region41: #{tpu_custom_call.1} parent=31 // pred_check
          %p210 = pneg %p91
        $region42: #{tpu_custom_call.1} parent=31 // pred_check_branch
          %212 = sbr.rel (%p210) target = $region44
        $region43: #{tpu_custom_call.1} parent=31 // pred_region
          %213 = dma.done [#allocation6], 8192
        $region44: #{tpu_custom_call.1} parent=31 // pred_fallthru
          _
        %s214 = sand.u32 %s31, 1
        %s215 = scalar_lea.sflag [#allocation3], %s214
        %s216 = sand.u32 %s31, 1
        %s217 = smul.addr %s216, 8
        %s218 = scalar_lea.vmem [#allocation2], %s217
        %p219 = pneg %p44
        %p220 = pneg %p41
        %s221 = sand.u32 %s23, 1
        %s222 = scalar_lea.sflag [#allocation6], %s221
        %s223 = sand.u32 %s57, 1
        %s224 = smul.addr %s223, 8
        %s225 = scalar_lea.vmem [#allocation5], %s224
        %p226 = pneg %p70
        %p227 = pneg %p67
        %p228 = pneg %p91
        %p229 = pneg %p88
        %p230 = pneg %p117
        %p231 = pneg %p114
        %s232 = sand.u32 %s104, 1
        %s233 = scalar_lea.sflag [#allocation4], %s232
        %s234 = sand.u32 %s104, 1
        %s235 = smul.addr %s234, 8
        %s236 = scalar_lea.vmem [#allocation8], %s235
        %v237 = vld [vmem:[%s196] sm:$0xff]
        %v238 = vld [vmem:[%s205] sm:$0xff]
        %v239 = vld [vmem:[#allocation7] sm:$0xff]
        %v240 = vld [vmem:[#allocation7 + $0x20] sm:$0xff]
        %v241 = vld [vmem:[#allocation7 + $0x40] sm:$0xff]
        %v242 = vld [vmem:[#allocation7 + $0x60] sm:$0xff]
        %v243 = vld [vmem:[#allocation7 + $0x80] sm:$0xff]
        %v244 = vld [vmem:[#allocation7 + $0xa0] sm:$0xff]
        %v245 = vld [vmem:[#allocation7 + $0xc0] sm:$0xff]
        %v246 = vld [vmem:[#allocation7 + $0xe0] sm:$0xff]
        %v247 = vld [vmem:[#allocation7 + $0x100] sm:$0xff]
        %v248 = vld [vmem:[#allocation7 + $0x120] sm:$0xff]
        %v249 = vld [vmem:[#allocation7 + $0x140] sm:$0xff]
        %v250 = vld [vmem:[#allocation7 + $0x160] sm:$0xff]
        %v251 = vld [vmem:[#allocation7 + $0x180] sm:$0xff]
        %v252 = vld [vmem:[#allocation7 + $0x1a0] sm:$0xff]
        %v253 = vld [vmem:[#allocation7 + $0x1c0] sm:$0xff]
        %v254 = vld [vmem:[#allocation7 + $0x1e0] sm:$0xff]
        %v255 = vld [vmem:[#allocation7 + $0x8] sm:$0xff]
        %v256 = vld [vmem:[#allocation7 + $0x10] sm:$0xff]
        %v257 = vld [vmem:[#allocation7 + $0x28] sm:$0xff]
        %v258 = vld [vmem:[#allocation7 + $0x30] sm:$0xff]
        %v259 = vld [vmem:[#allocation7 + $0x48] sm:$0xff]
        %v260 = vld [vmem:[#allocation7 + $0x50] sm:$0xff]
        %v261 = vld [vmem:[#allocation7 + $0x68] sm:$0xff]
        %v262 = vld [vmem:[#allocation7 + $0x70] sm:$0xff]
        %v263 = vld [vmem:[#allocation7 + $0x88] sm:$0xff]
        %v264 = vld [vmem:[#allocation7 + $0x90] sm:$0xff]
        %v265 = vld [vmem:[#allocation7 + $0xa8] sm:$0xff]
        %v266 = vld [vmem:[#allocation7 + $0xb0] sm:$0xff]
        %v267 = vld [vmem:[#allocation7 + $0xc8] sm:$0xff]
        %v268 = vld [vmem:[#allocation7 + $0xd0] sm:$0xff]
        %v269 = vld [vmem:[#allocation7 + $0xe8] sm:$0xff]
        %v270 = vld [vmem:[#allocation7 + $0xf0] sm:$0xff]
        %v271 = vld [vmem:[#allocation7 + $0x108] sm:$0xff]
        %v272 = vld [vmem:[#allocation7 + $0x110] sm:$0xff]
        %v273 = vld [vmem:[#allocation7 + $0x128] sm:$0xff]
        %v274 = vld [vmem:[#allocation7 + $0x130] sm:$0xff]
        %v275 = vld [vmem:[#allocation7 + $0x148] sm:$0xff]
        %v276 = vld [vmem:[#allocation7 + $0x150] sm:$0xff]
        %v277 = vld [vmem:[#allocation7 + $0x168] sm:$0xff]
        %v278 = vld [vmem:[#allocation7 + $0x170] sm:$0xff]
        %v279 = vld [vmem:[#allocation7 + $0x188] sm:$0xff]
        %v280 = vld [vmem:[#allocation7 + $0x190] sm:$0xff]
        %v281 = vld [vmem:[#allocation7 + $0x1a8] sm:$0xff]
        %v282 = vld [vmem:[#allocation7 + $0x1b0] sm:$0xff]
        %v283 = vld [vmem:[#allocation7 + $0x1c8] sm:$0xff]
        %v284 = vld [vmem:[#allocation7 + $0x1d0] sm:$0xff]
        %v285 = vld [vmem:[#allocation7 + $0x1e8] sm:$0xff]
        %v286 = vld [vmem:[#allocation7 + $0x1f0] sm:$0xff]
        %v287 = vld [vmem:[#allocation7 + $0x18] sm:$0xff]
        %v288 = vld [vmem:[#allocation7 + $0x38] sm:$0xff]
        %v289 = vld [vmem:[#allocation7 + $0x58] sm:$0xff]
        %v290 = vld [vmem:[#allocation7 + $0x78] sm:$0xff]
        %v291 = vld [vmem:[#allocation7 + $0x98] sm:$0xff]
        %v292 = vld [vmem:[#allocation7 + $0xb8] sm:$0xff]
        %v293 = vld [vmem:[#allocation7 + $0xd8] sm:$0xff]
        %v294 = vld [vmem:[#allocation7 + $0xf8] sm:$0xff]
        %v295 = vld [vmem:[#allocation7 + $0x118] sm:$0xff]
        %v296 = vld [vmem:[#allocation7 + $0x138] sm:$0xff]
        %v297 = vld [vmem:[#allocation7 + $0x158] sm:$0xff]
        %v298 = vld [vmem:[#allocation7 + $0x178] sm:$0xff]
        %v299 = vld [vmem:[#allocation7 + $0x198] sm:$0xff]
        %v300 = vld [vmem:[#allocation7 + $0x1b8] sm:$0xff]
        %v301 = vld [vmem:[#allocation7 + $0x1d8] sm:$0xff]
        %v302 = vld [vmem:[#allocation7 + $0x1f8] sm:$0xff]
        %303 = vmatprep.subr.mxu0 0.0
        %304 = vmatpush1.msra.mxu0 %v239
        %305 = vmatprep.subr.mxu0 0.0
        %306 = vmatpush1.msra.mxu0 %v240
        %307 = vmatprep.subr.mxu0 0.0
        %308 = vmatpush1.msra.mxu0 %v241
        %309 = vmatprep.subr.mxu0 0.0
        %310 = vmatpush1.msra.mxu0 %v242
        %311 = vmatprep.subr.mxu0 0.0
        %312 = vmatpush1.msra.mxu0 %v243
        %313 = vmatprep.subr.mxu0 0.0
        %314 = vmatpush1.msra.mxu0 %v244
        %315 = vmatprep.subr.mxu0 0.0
        %316 = vmatpush1.msra.mxu0 %v245
        %317 = vmatprep.subr.mxu0 0.0
        %318 = vmatpush1.msra.mxu0 %v246
        %319 = vmatprep.subr.mxu0 0.0
        %320 = vmatpush1.msra.mxu0 %v247
        %321 = vmatprep.subr.mxu0 0.0
        %322 = vmatpush1.msra.mxu0 %v248
        %323 = vmatprep.subr.mxu0 0.0
        %324 = vmatpush1.msra.mxu0 %v249
        %325 = vmatprep.subr.mxu0 0.0
        %326 = vmatpush1.msra.mxu0 %v250
        %327 = vmatprep.subr.mxu0 0.0
        %328 = vmatpush1.msra.mxu0 %v251
        %329 = vmatprep.subr.mxu0 0.0
        %330 = vmatpush1.msra.mxu0 %v252
        %331 = vmatprep.subr.mxu0 0.0
        %332 = vmatpush1.msra.mxu0 %v253
        %333 = vmatprep.subr.mxu0 0.0
        %334 = vmatpush1.msra.mxu0 %v254
        %335 = vmatprep.subr.mxu0 0.0
        %336 = vmatpush1.msra.mxu0 0.0
        %337 = vmatprep.subr.mxu0 0.0
        %338 = vmatpush1.msra.mxu0 0.0
        %339 = vmatprep.subr.mxu0 0.0
        %340 = vmatpush1.msra.mxu0 0.0
        %341 = vmatprep.subr.mxu0 0.0
        %342 = vmatpush1.msra.mxu0 0.0
        %343 = vmatprep.subr.mxu0 0.0
        %344 = vmatpush1.msra.mxu0 0.0
        %345 = vmatprep.subr.mxu0 0.0
        %346 = vmatpush1.msra.mxu0 0.0
        %347 = vmatprep.subr.mxu0 0.0
        %348 = vmatpush1.msra.mxu0 0.0
        %349 = vmatprep.subr.mxu0 0.0
        %350 = vmatpush1.msra.mxu0 0.0
        %351 = vmatprep.subr.mxu0 0.0
        %352 = vmatpush1.msra.mxu0 0.0
        %353 = vmatprep.subr.mxu0 0.0
        %354 = vmatpush1.msra.mxu0 0.0
        %355 = vmatprep.subr.mxu0 0.0
        %356 = vmatpush1.msra.mxu0 0.0
        %357 = vmatprep.subr.mxu0 0.0
        %358 = vmatpush1.msra.mxu0 0.0
        %359 = vmatprep.subr.mxu0 0.0
        %360 = vmatpush1.msra.mxu0 0.0
        %361 = vmatprep.subr.mxu0 0.0
        %362 = vmatpush1.msra.mxu0 0.0
        %363 = vmatprep.subr.mxu0 0.0
        %364 = vmatpush1.msra.mxu0 0.0
        %365 = vmatprep.subr.mxu0 0.0
        %366 = vmatpush1.msra.mxu0 0.0
        %367 = vmatprep.mubr.f32.mxu0 0.0
        %368 = vmatmul.mubr.f32.gmra.mrb[0].mxu0 %v237
        %v369 = vpop.f32.mrb[0].mxu0
        %v370 = vadd.f32 0.0, %v369
        %v371 = vpop.f32.mrb[0].mxu0
        %372 = vdwg.mxu0
        %373 = vmatprep.subr.mxu0 %v256
        %374 = vmatpush1.msra.mxu0 %v255
        %375 = vmatprep.subr.mxu0 %v258
        %376 = vmatpush1.msra.mxu0 %v257
        %377 = vmatprep.subr.mxu0 %v260
        %378 = vmatpush1.msra.mxu0 %v259
        %379 = vmatprep.subr.mxu0 %v262
        %380 = vmatpush1.msra.mxu0 %v261
        %381 = vmatprep.subr.mxu0 %v264
        %382 = vmatpush1.msra.mxu0 %v263
        %383 = vmatprep.subr.mxu0 %v266
        %384 = vmatpush1.msra.mxu0 %v265
        %385 = vmatprep.subr.mxu0 %v268
        %386 = vmatpush1.msra.mxu0 %v267
        %387 = vmatprep.subr.mxu0 %v270
        %388 = vmatpush1.msra.mxu0 %v269
        %389 = vmatprep.subr.mxu0 %v272
        %390 = vmatpush1.msra.mxu0 %v271
        %391 = vmatprep.subr.mxu0 %v274
        %392 = vmatpush1.msra.mxu0 %v273
        %393 = vmatprep.subr.mxu0 %v276
        %394 = vmatpush1.msra.mxu0 %v275
        %395 = vmatprep.subr.mxu0 %v278
        %396 = vmatpush1.msra.mxu0 %v277
        %397 = vmatprep.subr.mxu0 %v280
        %398 = vmatpush1.msra.mxu0 %v279
        %399 = vmatprep.subr.mxu0 %v282
        %400 = vmatpush1.msra.mxu0 %v281
        %401 = vmatprep.subr.mxu0 %v284
        %402 = vmatpush1.msra.mxu0 %v283
        %403 = vmatprep.subr.mxu0 %v286
        %404 = vmatpush1.msra.mxu0 %v285
        %405 = vmatprep.subr.mxu0 0.0
        %406 = vmatpush1.msra.mxu0 0.0
        %407 = vmatprep.subr.mxu0 0.0
        %408 = vmatpush1.msra.mxu0 0.0
        %409 = vmatprep.subr.mxu0 0.0
        %410 = vmatpush1.msra.mxu0 0.0
        %411 = vmatprep.subr.mxu0 0.0
        %412 = vmatpush1.msra.mxu0 0.0
        %413 = vmatprep.subr.mxu0 0.0
        %414 = vmatpush1.msra.mxu0 0.0
        %415 = vmatprep.subr.mxu0 0.0
        %416 = vmatpush1.msra.mxu0 0.0
        %417 = vmatprep.subr.mxu0 0.0
        %418 = vmatpush1.msra.mxu0 0.0
        %419 = vmatprep.subr.mxu0 0.0
        %420 = vmatpush1.msra.mxu0 0.0
        %421 = vmatprep.subr.mxu0 0.0
        %422 = vmatpush1.msra.mxu0 0.0
        %423 = vmatprep.subr.mxu0 0.0
        %424 = vmatpush1.msra.mxu0 0.0
        %425 = vmatprep.subr.mxu0 0.0
        %426 = vmatpush1.msra.mxu0 0.0
        %427 = vmatprep.subr.mxu0 0.0
        %428 = vmatpush1.msra.mxu0 0.0
        %429 = vmatprep.subr.mxu0 0.0
        %430 = vmatpush1.msra.mxu0 0.0
        %431 = vmatprep.subr.mxu0 0.0
        %432 = vmatpush1.msra.mxu0 0.0
        %433 = vmatprep.subr.mxu0 0.0
        %434 = vmatpush1.msra.mxu0 0.0
        %435 = vmatprep.subr.mxu0 0.0
        %436 = vmatpush1.msra.mxu0 0.0
        %437 = vmatprep.mubr.f32.mxu0 0.0
        %438 = vmatmul.mubr.f32.gmra.mrb[0].mxu0 %v238
        %v439 = vpop.f32.mrb[0].mxu0
        %v440 = vadd.f32 0.0, %v439
        %v441 = vpop.f32.mrb[0].mxu0
        %v442 = vadd.f32 0.0, %v441
        %443 = vdwg.mxu0
        %v444 = vlaneseq
        %v445 = vshrl.u32 %v444, 7
        %v446 = vadd.s32 %v445, 8
        %v447 = vadd.s32 %v445, 16
        %v448 = vadd.s32 %v445, 24
        %v449 = vadd.s32 %v445, 32
        %v450 = vadd.s32 %v445, 40
        %v451 = vadd.s32 %v445, 48
        %v452 = vadd.s32 %v445, 56
        %v453 = vadd.s32 %v445, 64
        %v454 = vadd.s32 %v445, 72
        %v455 = vadd.s32 %v445, 80
        %v456 = vadd.s32 %v445, 88
        %v457 = vadd.s32 %v445, 96
        %v458 = vadd.s32 %v445, 104
        %v459 = vadd.s32 %v445, 112
        %v460 = vadd.s32 %v445, 120
        %v461 = vlaneseq
        %v462 = vand.u32 %v461, 127
        %v463 = vmul.u32 %v462, 4
        %vm464 = vcmp.ge.s32.totalorder %v445, %v463
        %vm465 = vcmp.ge.s32.totalorder %v446, %v463
        %vm466 = vcmp.ge.s32.totalorder %v447, %v463
        %vm467 = vcmp.ge.s32.totalorder %v448, %v463
        %vm468 = vcmp.ge.s32.totalorder %v449, %v463
        %vm469 = vcmp.ge.s32.totalorder %v450, %v463
        %vm470 = vcmp.ge.s32.totalorder %v451, %v463
        %vm471 = vcmp.ge.s32.totalorder %v452, %v463
        %vm472 = vcmp.ge.s32.totalorder %v453, %v463
        %vm473 = vcmp.ge.s32.totalorder %v454, %v463
        %vm474 = vcmp.ge.s32.totalorder %v455, %v463
        %vm475 = vcmp.ge.s32.totalorder %v456, %v463
        %vm476 = vcmp.ge.s32.totalorder %v457, %v463
        %vm477 = vcmp.ge.s32.totalorder %v458, %v463
        %vm478 = vcmp.ge.s32.totalorder %v459, %v463
        %vm479 = vcmp.ge.s32.totalorder %v460, %v463
        %v480 = vadd.s32 %v462, 1
        %v481 = vmul.u32 %v480, 4
        %vm482 = vcmp.lt.s32.totalorder %v445, %v481
        %vm483 = vcmp.lt.s32.totalorder %v446, %v481
        %vm484 = vcmp.lt.s32.totalorder %v447, %v481
        %vm485 = vcmp.lt.s32.totalorder %v448, %v481
        %vm486 = vcmp.lt.s32.totalorder %v449, %v481
        %vm487 = vcmp.lt.s32.totalorder %v450, %v481
        %vm488 = vcmp.lt.s32.totalorder %v451, %v481
        %vm489 = vcmp.lt.s32.totalorder %v452, %v481
        %vm490 = vcmp.lt.s32.totalorder %v453, %v481
        %vm491 = vcmp.lt.s32.totalorder %v454, %v481
        %vm492 = vcmp.lt.s32.totalorder %v455, %v481
        %vm493 = vcmp.lt.s32.totalorder %v456, %v481
        %vm494 = vcmp.lt.s32.totalorder %v457, %v481
        %vm495 = vcmp.lt.s32.totalorder %v458, %v481
        %vm496 = vcmp.lt.s32.totalorder %v459, %v481
        %vm497 = vcmp.lt.s32.totalorder %v460, %v481
        %vm498 = vmand %vm464, %vm482
        %vm499 = vmand %vm465, %vm483
        %vm500 = vmand %vm466, %vm484
        %vm501 = vmand %vm467, %vm485
        %vm502 = vmand %vm468, %vm486
        %vm503 = vmand %vm469, %vm487
        %vm504 = vmand %vm470, %vm488
        %vm505 = vmand %vm471, %vm489
        %vm506 = vmand %vm472, %vm490
        %vm507 = vmand %vm473, %vm491
        %vm508 = vmand %vm474, %vm492
        %vm509 = vmand %vm475, %vm493
        %vm510 = vmand %vm476, %vm494
        %vm511 = vmand %vm477, %vm495
        %vm512 = vmand %vm478, %vm496
        %vm513 = vmand %vm479, %vm497
        %v514 = vsel %vm498, 1, 0
        %v515 = vsel %vm499, 1, 0
        %v516 = vsel %vm500, 1, 0
        %v517 = vsel %vm501, 1, 0
        %v518 = vsel %vm502, 1, 0
        %v519 = vsel %vm503, 1, 0
        %v520 = vsel %vm504, 1, 0
        %v521 = vsel %vm505, 1, 0
        %v522 = vsel %vm506, 1, 0
        %v523 = vsel %vm507, 1, 0
        %v524 = vsel %vm508, 1, 0
        %v525 = vsel %vm509, 1, 0
        %v526 = vsel %vm510, 1, 0
        %v527 = vsel %vm511, 1, 0
        %v528 = vsel %vm512, 1, 0
        %v529 = vsel %vm513, 1, 0
        %v530 = vcvt.s32.f32 %v514
        %v531 = vcvt.s32.f32 %v515
        %v532 = vcvt.s32.f32 %v516
        %v533 = vcvt.s32.f32 %v517
        %v534 = vcvt.s32.f32 %v518
        %v535 = vcvt.s32.f32 %v519
        %v536 = vcvt.s32.f32 %v520
        %v537 = vcvt.s32.f32 %v521
        %v538 = vcvt.s32.f32 %v522
        %v539 = vcvt.s32.f32 %v523
        %v540 = vcvt.s32.f32 %v524
        %v541 = vcvt.s32.f32 %v525
        %v542 = vcvt.s32.f32 %v526
        %v543 = vcvt.s32.f32 %v527
        %v544 = vcvt.s32.f32 %v528
        %v545 = vcvt.s32.f32 %v529
        %v546 = vmul.u32 %v445, 4
        %vm547 = vcmp.ge.s32.totalorder %v462, %v546
        %v548 = vadd.s32 %v445, 1
        %v549 = vmul.u32 %v548, 4
        %vm550 = vcmp.lt.s32.totalorder %v462, %v549
        %vm551 = vmand %vm547, %vm550
        %v552 = vsel %vm551, 1, 0
        %v553 = vcvt.s32.f32 %v552
        %v555 = vcombine.high %v370, %v370
        %v557 = vunpack.c.l.s4 1966171168
        %v558 = vunpack.c.0.s8 %v557
        %v559 = vlaneseq
        %v560 = vshrl.u32 %v559, 7
        %v561 = vsub.s32 %v558, %v560
        %v562 = vrot.slane %v370, %v561
        %v564 = vunpack.c.l.s4 1966171168
        %v565 = vunpack.c.0.s8 %v564
        %v566 = vlaneseq
        %v567 = vshrl.u32 %v566, 7
        %v568 = vsub.s32 %v565, %v567
        %v569 = vrot.slane %v555, %v568
        %v570 = vcombine.high %v562, %v562
        %v571 = vcombine.high %v569, %v569
        %v573 = vunpack.c.l.s4 1966171168
        %v574 = vunpack.c.0.s8 %v573
        %v575 = vlaneseq
        %v576 = vshrl.u32 %v575, 7
        %v577 = vsub.s32 %v574, %v576
        %v578 = vrot.slane %v562, %v577
        %v580 = vunpack.c.l.s4 1966171168
        %v581 = vunpack.c.0.s8 %v580
        %v582 = vlaneseq
        %v583 = vshrl.u32 %v582, 7
        %v584 = vsub.s32 %v581, %v583
        %v585 = vrot.slane %v569, %v584
        %v587 = vunpack.c.l.s4 1966171168
        %v588 = vunpack.c.0.s8 %v587
        %v589 = vlaneseq
        %v590 = vshrl.u32 %v589, 7
        %v591 = vsub.s32 %v588, %v590
        %v592 = vrot.slane %v570, %v591
        %v594 = vunpack.c.l.s4 1966171168
        %v595 = vunpack.c.0.s8 %v594
        %v596 = vlaneseq
        %v597 = vshrl.u32 %v596, 7
        %v598 = vsub.s32 %v595, %v597
        %v599 = vrot.slane %v571, %v598
        %v600 = vcombine.high %v578, %v578
        %v601 = vcombine.high %v585, %v585
        %v602 = vcombine.high %v592, %v592
        %v603 = vcombine.high %v599, %v599
        %v604 = vlaneseq
        %v605 = vshrl.u32 %v604, 7
        %v606 = vsub.s32 0, %v605
        %v607 = vrot.slane %v578, %v606
        %v608 = vlaneseq
        %v609 = vshrl.u32 %v608, 7
        %v610 = vsub.s32 0, %v609
        %v611 = vrot.slane %v592, %v610
        %v612 = vlaneseq
        %v613 = vshrl.u32 %v612, 7
        %v614 = vsub.s32 0, %v613
        %v615 = vrot.slane %v600, %v614
        %v616 = vlaneseq
        %v617 = vshrl.u32 %v616, 7
        %v618 = vsub.s32 0, %v617
        %v619 = vrot.slane %v602, %v618
        %v620 = vlaneseq
        %v621 = vshrl.u32 %v620, 7
        %v622 = vsub.s32 0, %v621
        %v623 = vrot.slane %v585, %v622
        %v624 = vlaneseq
        %v625 = vshrl.u32 %v624, 7
        %v626 = vsub.s32 0, %v625
        %v627 = vrot.slane %v599, %v626
        %v628 = vlaneseq
        %v629 = vshrl.u32 %v628, 7
        %v630 = vsub.s32 0, %v629
        %v631 = vrot.slane %v601, %v630
        %v632 = vlaneseq
        %v633 = vshrl.u32 %v632, 7
        %v634 = vsub.s32 0, %v633
        %v635 = vrot.slane %v603, %v634
        %v644 = vmul.f32 %v607, %v440
        %v645 = vmul.f32 %v611, %v440
        %v646 = vmul.f32 %v615, %v440
        %v647 = vmul.f32 %v619, %v440
        %v648 = vmul.f32 %v623, %v440
        %v649 = vmul.f32 %v627, %v440
        %v650 = vmul.f32 %v631, %v440
        %v651 = vmul.f32 %v635, %v440
        %652 = vmatprep.subr.mxu0 0.0
        %653 = vmatpush1.msra.mxu0 %v530
        %654 = vmatprep.subr.mxu0 0.0
        %655 = vmatpush1.msra.mxu0 %v531
        %656 = vmatprep.subr.mxu0 0.0
        %657 = vmatpush1.msra.mxu0 %v532
        %658 = vmatprep.subr.mxu0 0.0
        %659 = vmatpush1.msra.mxu0 %v533
        %660 = vmatprep.subr.mxu0 0.0
        %661 = vmatpush1.msra.mxu0 %v534
        %662 = vmatprep.subr.mxu0 0.0
        %663 = vmatpush1.msra.mxu0 %v535
        %664 = vmatprep.subr.mxu0 0.0
        %665 = vmatpush1.msra.mxu0 %v536
        %666 = vmatprep.subr.mxu0 0.0
        %667 = vmatpush1.msra.mxu0 %v537
        %668 = vmatprep.subr.mxu0 0.0
        %669 = vmatpush1.msra.mxu0 %v538
        %670 = vmatprep.subr.mxu0 0.0
        %671 = vmatpush1.msra.mxu0 %v539
        %672 = vmatprep.subr.mxu0 0.0
        %673 = vmatpush1.msra.mxu0 %v540
        %674 = vmatprep.subr.mxu0 0.0
        %675 = vmatpush1.msra.mxu0 %v541
        %676 = vmatprep.subr.mxu0 0.0
        %677 = vmatpush1.msra.mxu0 %v542
        %678 = vmatprep.subr.mxu0 0.0
        %679 = vmatpush1.msra.mxu0 %v543
        %680 = vmatprep.subr.mxu0 0.0
        %681 = vmatpush1.msra.mxu0 %v544
        %682 = vmatprep.subr.mxu0 0.0
        %683 = vmatpush1.msra.mxu0 %v545
        %684 = vmatprep.subr.mxu0 0.0
        %685 = vmatpush1.msra.mxu0 0.0
        %686 = vmatprep.subr.mxu0 0.0
        %687 = vmatpush1.msra.mxu0 0.0
        %688 = vmatprep.subr.mxu0 0.0
        %689 = vmatpush1.msra.mxu0 0.0
        %690 = vmatprep.subr.mxu0 0.0
        %691 = vmatpush1.msra.mxu0 0.0
        %692 = vmatprep.subr.mxu0 0.0
        %693 = vmatpush1.msra.mxu0 0.0
        %694 = vmatprep.subr.mxu0 0.0
        %695 = vmatpush1.msra.mxu0 0.0
        %696 = vmatprep.subr.mxu0 0.0
        %697 = vmatpush1.msra.mxu0 0.0
        %698 = vmatprep.subr.mxu0 0.0
        %699 = vmatpush1.msra.mxu0 0.0
        %700 = vmatprep.subr.mxu0 0.0
        %701 = vmatpush1.msra.mxu0 0.0
        %702 = vmatprep.subr.mxu0 0.0
        %703 = vmatpush1.msra.mxu0 0.0
        %704 = vmatprep.subr.mxu0 0.0
        %705 = vmatpush1.msra.mxu0 0.0
        %706 = vmatprep.subr.mxu0 0.0
        %707 = vmatpush1.msra.mxu0 0.0
        %708 = vmatprep.subr.mxu0 0.0
        %709 = vmatpush1.msra.mxu0 0.0
        %710 = vmatprep.subr.mxu0 0.0
        %711 = vmatpush1.msra.mxu0 0.0
        %712 = vmatprep.subr.mxu0 0.0
        %713 = vmatpush1.msra.mxu0 0.0
        %714 = vmatprep.subr.mxu0 0.0
        %715 = vmatpush1.msra.mxu0 0.0
        %716 = vmatprep.mubr.f32.mxu0 0.0
        %717 = vmatmul.mubr.f32.gmra.mrb[0].mxu0 %v644
        %v718 = vpop.f32.mrb[0].mxu0
        %v719 = vadd.f32 0.0, %v718
        %v720 = vpop.f32.mrb[0].mxu0
        %721 = vmatprep.mubr.f32.mxu0 0.0
        %722 = vmatmul.mubr.f32.gmra.mrb[0].mxu0 %v645
        %v723 = vpop.f32.mrb[0].mxu0
        %v724 = vadd.f32 0.0, %v723
        %v725 = vpop.f32.mrb[0].mxu0
        %726 = vmatprep.mubr.f32.mxu0 0.0
        %727 = vmatmul.mubr.f32.gmra.mrb[0].mxu0 %v646
        %v728 = vpop.f32.mrb[0].mxu0
        %v729 = vadd.f32 0.0, %v728
        %v730 = vpop.f32.mrb[0].mxu0
        %731 = vmatprep.mubr.f32.mxu0 0.0
        %732 = vmatmul.mubr.f32.gmra.mrb[0].mxu0 %v647
        %v733 = vpop.f32.mrb[0].mxu0
        %v734 = vadd.f32 0.0, %v733
        %v735 = vpop.f32.mrb[0].mxu0
        %736 = vmatprep.mubr.f32.mxu0 0.0
        %737 = vmatmul.mubr.f32.gmra.mrb[0].mxu0 %v648
        %v738 = vpop.f32.mrb[0].mxu0
        %v739 = vadd.f32 0.0, %v738
        %v740 = vpop.f32.mrb[0].mxu0
        %741 = vmatprep.mubr.f32.mxu0 0.0
        %742 = vmatmul.mubr.f32.gmra.mrb[0].mxu0 %v649
        %v743 = vpop.f32.mrb[0].mxu0
        %v744 = vadd.f32 0.0, %v743
        %v745 = vpop.f32.mrb[0].mxu0
        %746 = vmatprep.mubr.f32.mxu0 0.0
        %747 = vmatmul.mubr.f32.gmra.mrb[0].mxu0 %v650
        %v748 = vpop.f32.mrb[0].mxu0
        %v749 = vadd.f32 0.0, %v748
        %v750 = vpop.f32.mrb[0].mxu0
        %751 = vmatprep.mubr.f32.mxu0 0.0
        %752 = vmatmul.mubr.f32.gmra.mrb[0].mxu0 %v651
        %v753 = vpop.f32.mrb[0].mxu0
        %v754 = vadd.f32 0.0, %v753
        %v755 = vpop.f32.mrb[0].mxu0
        %756 = vdwg.mxu0
        %vm757 = vcmask 64512
        %v758 = vsel %vm757, %v719, -inf
        %v759 = vrot.slane %v758, 4
        %v760 = vmax.f32 %v758, %v759
        %v761 = vrot.slane %v760, 2
        %v762 = vmax.f32 %v760, %v761
        %v763 = vrot.slane %v762, 1
        %v764 = vmax.f32 %v762, %v763
        %v765 = vsel %vm757, %v724, -inf
        %v766 = vrot.slane %v765, 4
        %v767 = vmax.f32 %v765, %v766
        %v768 = vrot.slane %v767, 2
        %v769 = vmax.f32 %v767, %v768
        %v770 = vrot.slane %v769, 1
        %v771 = vmax.f32 %v769, %v770
        %v772 = vsel %vm757, %v729, -inf
        %v773 = vrot.slane %v772, 4
        %v774 = vmax.f32 %v772, %v773
        %v775 = vrot.slane %v774, 2
        %v776 = vmax.f32 %v774, %v775
        %v777 = vrot.slane %v776, 1
        %v778 = vmax.f32 %v776, %v777
        %v779 = vsel %vm757, %v734, -inf
        %v780 = vrot.slane %v779, 4
        %v781 = vmax.f32 %v779, %v780
        %v782 = vrot.slane %v781, 2
        %v783 = vmax.f32 %v781, %v782
        %v784 = vrot.slane %v783, 1
        %v785 = vmax.f32 %v783, %v784
        %v786 = vsel %vm757, %v739, -inf
        %v787 = vrot.slane %v786, 4
        %v788 = vmax.f32 %v786, %v787
        %v789 = vrot.slane %v788, 2
        %v790 = vmax.f32 %v788, %v789
        %v791 = vrot.slane %v790, 1
        %v792 = vmax.f32 %v790, %v791
        %v793 = vsel %vm757, %v744, -inf
        %v794 = vrot.slane %v793, 4
        %v795 = vmax.f32 %v793, %v794
        %v796 = vrot.slane %v795, 2
        %v797 = vmax.f32 %v795, %v796
        %v798 = vrot.slane %v797, 1
        %v799 = vmax.f32 %v797, %v798
        %v800 = vsel %vm757, %v749, -inf
        %v801 = vrot.slane %v800, 4
        %v802 = vmax.f32 %v800, %v801
        %v803 = vrot.slane %v802, 2
        %v804 = vmax.f32 %v802, %v803
        %v805 = vrot.slane %v804, 1
        %v806 = vmax.f32 %v804, %v805
        %v807 = vsel %vm757, %v754, -inf
        %v808 = vrot.slane %v807, 4
        %v809 = vmax.f32 %v807, %v808
        %v810 = vrot.slane %v809, 2
        %v811 = vmax.f32 %v809, %v810
        %v812 = vrot.slane %v811, 1
        %v813 = vmax.f32 %v811, %v812
        %v814 = vsub.f32 %v719, %v764
        %v815 = vsub.f32 %v724, %v771
        %v816 = vsub.f32 %v729, %v778
        %v817 = vsub.f32 %v734, %v785
        %v818 = vsub.f32 %v739, %v792
        %v819 = vsub.f32 %v744, %v799
        %v820 = vsub.f32 %v749, %v806
        %v821 = vsub.f32 %v754, %v813
        %v822 = vmul.f32 %v814, 1.442695
        %v823 = vpow.pop %v822
        %v824 = vmul.f32 %v815, 1.442695
        %v825 = vpow.pop %v824
        %v826 = vmul.f32 %v816, 1.442695
        %v827 = vpow.pop %v826
        %v828 = vmul.f32 %v817, 1.442695
        %v829 = vpow.pop %v828
        %v830 = vmul.f32 %v818, 1.442695
        %v831 = vpow.pop %v830
        %v832 = vmul.f32 %v819, 1.442695
        %v833 = vpow.pop %v832
        %v834 = vmul.f32 %v820, 1.442695
        %v835 = vpow.pop %v834
        %v836 = vmul.f32 %v821, 1.442695
        %v837 = vpow.pop %v836
        %v838 = vsel %vm757, %v823, 0.0
        %v839 = vrot.slane %v838, 4
        %v840 = vadd.f32 %v838, %v839
        %v841 = vrot.slane %v840, 2
        %v842 = vadd.f32 %v840, %v841
        %v843 = vrot.slane %v842, 1
        %v844 = vadd.f32 %v842, %v843
        %v845 = vsel %vm757, %v825, 0.0
        %v846 = vrot.slane %v845, 4
        %v847 = vadd.f32 %v845, %v846
        %v848 = vrot.slane %v847, 2
        %v849 = vadd.f32 %v847, %v848
        %v850 = vrot.slane %v849, 1
        %v851 = vadd.f32 %v849, %v850
        %v852 = vsel %vm757, %v827, 0.0
        %v853 = vrot.slane %v852, 4
        %v854 = vadd.f32 %v852, %v853
        %v855 = vrot.slane %v854, 2
        %v856 = vadd.f32 %v854, %v855
        %v857 = vrot.slane %v856, 1
        %v858 = vadd.f32 %v856, %v857
        %v859 = vsel %vm757, %v829, 0.0
        %v860 = vrot.slane %v859, 4
        %v861 = vadd.f32 %v859, %v860
        %v862 = vrot.slane %v861, 2
        %v863 = vadd.f32 %v861, %v862
        %v864 = vrot.slane %v863, 1
        %v865 = vadd.f32 %v863, %v864
        %v866 = vsel %vm757, %v831, 0.0
        %v867 = vrot.slane %v866, 4
        %v868 = vadd.f32 %v866, %v867
        %v869 = vrot.slane %v868, 2
        %v870 = vadd.f32 %v868, %v869
        %v871 = vrot.slane %v870, 1
        %v872 = vadd.f32 %v870, %v871
        %v873 = vsel %vm757, %v833, 0.0
        %v874 = vrot.slane %v873, 4
        %v875 = vadd.f32 %v873, %v874
        %v876 = vrot.slane %v875, 2
        %v877 = vadd.f32 %v875, %v876
        %v878 = vrot.slane %v877, 1
        %v879 = vadd.f32 %v877, %v878
        %v880 = vsel %vm757, %v835, 0.0
        %v881 = vrot.slane %v880, 4
        %v882 = vadd.f32 %v880, %v881
        %v883 = vrot.slane %v882, 2
        %v884 = vadd.f32 %v882, %v883
        %v885 = vrot.slane %v884, 1
        %v886 = vadd.f32 %v884, %v885
        %v887 = vsel %vm757, %v837, 0.0
        %v888 = vrot.slane %v887, 4
        %v889 = vadd.f32 %v887, %v888
        %v890 = vrot.slane %v889, 2
        %v891 = vadd.f32 %v889, %v890
        %v892 = vrot.slane %v891, 1
        %v893 = vadd.f32 %v891, %v892
        %v894 = vrcp.pop %v844
        %v895 = vrcp.pop %v851
        %v896 = vrcp.pop %v858
        %v897 = vrcp.pop %v865
        %v898 = vrcp.pop %v872
        %v899 = vrcp.pop %v879
        %v900 = vrcp.pop %v886
        %v901 = vrcp.pop %v893
        %v902 = vmul.f32 %v823, %v894
        %v903 = vmul.f32 %v825, %v895
        %v904 = vmul.f32 %v827, %v896
        %v905 = vmul.f32 %v829, %v897
        %v906 = vmul.f32 %v831, %v898
        %v907 = vmul.f32 %v833, %v899
        %v908 = vmul.f32 %v835, %v900
        %v909 = vmul.f32 %v837, %v901
        %v911 = vsel %vm757, %v902, 0
        %v914 = vsel %vm757, %v903, 0
        %v917 = vsel %vm757, %v904, 0
        %v920 = vsel %vm757, %v905, 0
        %v923 = vsel %vm757, %v906, 0
        %v926 = vsel %vm757, %v907, 0
        %v929 = vsel %vm757, %v908, 0
        %v932 = vsel %vm757, %v909, 0
        %934 = vmatprep.subr.mxu0 0.0
        %935 = vmatpush1.msra.mxu0 %v553
        %936 = vmatprep.subr.mxu0 0.0
        %937 = vmatpush1.msra.mxu0 0.0
        %938 = vmatprep.subr.mxu0 0.0
        %939 = vmatpush1.msra.mxu0 0.0
        %940 = vmatprep.subr.mxu0 0.0
        %941 = vmatpush1.msra.mxu0 0.0
        %942 = vmatprep.subr.mxu0 0.0
        %943 = vmatpush1.msra.mxu0 0.0
        %944 = vmatprep.subr.mxu0 0.0
        %945 = vmatpush1.msra.mxu0 0.0
        %946 = vmatprep.subr.mxu0 0.0
        %947 = vmatpush1.msra.mxu0 0.0
        %948 = vmatprep.subr.mxu0 0.0
        %949 = vmatpush1.msra.mxu0 0.0
        %950 = vmatprep.subr.mxu0 0.0
        %951 = vmatpush1.msra.mxu0 0.0
        %952 = vmatprep.subr.mxu0 0.0
        %953 = vmatpush1.msra.mxu0 0.0
        %954 = vmatprep.subr.mxu0 0.0
        %955 = vmatpush1.msra.mxu0 0.0
        %956 = vmatprep.subr.mxu0 0.0
        %957 = vmatpush1.msra.mxu0 0.0
        %958 = vmatprep.subr.mxu0 0.0
        %959 = vmatpush1.msra.mxu0 0.0
        %960 = vmatprep.subr.mxu0 0.0
        %961 = vmatpush1.msra.mxu0 0.0
        %962 = vmatprep.subr.mxu0 0.0
        %963 = vmatpush1.msra.mxu0 0.0
        %964 = vmatprep.subr.mxu0 0.0
        %965 = vmatpush1.msra.mxu0 0.0
        %966 = vmatprep.subr.mxu0 0.0
        %967 = vmatpush1.msra.mxu0 0.0
        %968 = vmatprep.subr.mxu0 0.0
        %969 = vmatpush1.msra.mxu0 0.0
        %970 = vmatprep.subr.mxu0 0.0
        %971 = vmatpush1.msra.mxu0 0.0
        %972 = vmatprep.subr.mxu0 0.0
        %973 = vmatpush1.msra.mxu0 0.0
        %974 = vmatprep.subr.mxu0 0.0
        %975 = vmatpush1.msra.mxu0 0.0
        %976 = vmatprep.subr.mxu0 0.0
        %977 = vmatpush1.msra.mxu0 0.0
        %978 = vmatprep.subr.mxu0 0.0
        %979 = vmatpush1.msra.mxu0 0.0
        %980 = vmatprep.subr.mxu0 0.0
        %981 = vmatpush1.msra.mxu0 0.0
        %982 = vmatprep.subr.mxu0 0.0
        %983 = vmatpush1.msra.mxu0 0.0
        %984 = vmatprep.subr.mxu0 0.0
        %985 = vmatpush1.msra.mxu0 0.0
        %986 = vmatprep.subr.mxu0 0.0
        %987 = vmatpush1.msra.mxu0 0.0
        %988 = vmatprep.subr.mxu0 0.0
        %989 = vmatpush1.msra.mxu0 0.0
        %990 = vmatprep.subr.mxu0 0.0
        %991 = vmatpush1.msra.mxu0 0.0
        %992 = vmatprep.subr.mxu0 0.0
        %993 = vmatpush1.msra.mxu0 0.0
        %994 = vmatprep.subr.mxu0 0.0
        %995 = vmatpush1.msra.mxu0 0.0
        %996 = vmatprep.subr.mxu0 0.0
        %997 = vmatpush1.msra.mxu0 0.0
        %998 = vmatprep.mubr.f32.mxu0 0.0
        %999 = vmatmul.mubr.f32.gmra.mrb[0].mxu0 %v911
        %v1000 = vpop.f32.mrb[0].mxu0
        %v1001 = vadd.f32 0.0, %v1000
        %v1002 = vpop.f32.mrb[0].mxu0
        %1003 = vmatprep.mubr.f32.mxu0 0.0
        %1004 = vmatmul.mubr.f32.gmra.mrb[0].mxu0 %v914
        %v1005 = vpop.f32.mrb[0].mxu0
        %v1006 = vadd.f32 0.0, %v1005
        %v1007 = vpop.f32.mrb[0].mxu0
        %1008 = vmatprep.mubr.f32.mxu0 0.0
        %1009 = vmatmul.mubr.f32.gmra.mrb[0].mxu0 %v917
        %v1010 = vpop.f32.mrb[0].mxu0
        %v1011 = vadd.f32 0.0, %v1010
        %v1012 = vpop.f32.mrb[0].mxu0
        %1013 = vmatprep.mubr.f32.mxu0 0.0
        %1014 = vmatmul.mubr.f32.gmra.mrb[0].mxu0 %v920
        %v1015 = vpop.f32.mrb[0].mxu0
        %v1016 = vadd.f32 0.0, %v1015
        %v1017 = vpop.f32.mrb[0].mxu0
        %1018 = vmatprep.mubr.f32.mxu0 0.0
        %1019 = vmatmul.mubr.f32.gmra.mrb[0].mxu0 %v923
        %v1020 = vpop.f32.mrb[0].mxu0
        %v1021 = vadd.f32 0.0, %v1020
        %v1022 = vpop.f32.mrb[0].mxu0
        %1023 = vmatprep.mubr.f32.mxu0 0.0
        %1024 = vmatmul.mubr.f32.gmra.mrb[0].mxu0 %v926
        %v1025 = vpop.f32.mrb[0].mxu0
        %v1026 = vadd.f32 0.0, %v1025
        %v1027 = vpop.f32.mrb[0].mxu0
        %1028 = vmatprep.mubr.f32.mxu0 0.0
        %1029 = vmatmul.mubr.f32.gmra.mrb[0].mxu0 %v929
        %v1030 = vpop.f32.mrb[0].mxu0
        %v1031 = vadd.f32 0.0, %v1030
        %v1032 = vpop.f32.mrb[0].mxu0
        %1033 = vmatprep.mubr.f32.mxu0 0.0
        %1034 = vmatmul.mubr.f32.gmra.mrb[0].mxu0 %v932
        %v1035 = vpop.f32.mrb[0].mxu0
        %v1036 = vadd.f32 0.0, %v1035
        %v1037 = vpop.f32.mrb[0].mxu0
        %1038 = vdwg.mxu0
        %v1039 = vmul.f32 %v1001, %v442
        %v1040 = vmul.f32 %v1006, %v442
        %v1041 = vmul.f32 %v1011, %v442
        %v1042 = vmul.f32 %v1016, %v442
        %v1043 = vmul.f32 %v1021, %v442
        %v1044 = vmul.f32 %v1026, %v442
        %v1045 = vmul.f32 %v1031, %v442
        %v1046 = vmul.f32 %v1036, %v442
        %v1047 = vrot.slane %v1039, 4
        %v1048 = vadd.f32 %v1039, %v1047
        %v1049 = vrot.slane %v1048, 2
        %v1050 = vadd.f32 %v1048, %v1049
        %v1051 = vrot.slane %v1050, 1
        %v1052 = vadd.f32 %v1050, %v1051
        %v1053 = vrot.slane %v1040, 4
        %v1054 = vadd.f32 %v1040, %v1053
        %v1055 = vrot.slane %v1054, 2
        %v1056 = vadd.f32 %v1054, %v1055
        %v1057 = vrot.slane %v1056, 1
        %v1058 = vadd.f32 %v1056, %v1057
        %v1059 = vrot.slane %v1041, 4
        %v1060 = vadd.f32 %v1041, %v1059
        %v1061 = vrot.slane %v1060, 2
        %v1062 = vadd.f32 %v1060, %v1061
        %v1063 = vrot.slane %v1062, 1
        %v1064 = vadd.f32 %v1062, %v1063
        %v1065 = vrot.slane %v1042, 4
        %v1066 = vadd.f32 %v1042, %v1065
        %v1067 = vrot.slane %v1066, 2
        %v1068 = vadd.f32 %v1066, %v1067
        %v1069 = vrot.slane %v1068, 1
        %v1070 = vadd.f32 %v1068, %v1069
        %v1071 = vrot.slane %v1043, 4
        %v1072 = vadd.f32 %v1043, %v1071
        %v1073 = vrot.slane %v1072, 2
        %v1074 = vadd.f32 %v1072, %v1073
        %v1075 = vrot.slane %v1074, 1
        %v1076 = vadd.f32 %v1074, %v1075
        %v1077 = vrot.slane %v1044, 4
        %v1078 = vadd.f32 %v1044, %v1077
        %v1079 = vrot.slane %v1078, 2
        %v1080 = vadd.f32 %v1078, %v1079
        %v1081 = vrot.slane %v1080, 1
        %v1082 = vadd.f32 %v1080, %v1081
        %v1083 = vrot.slane %v1045, 4
        %v1084 = vadd.f32 %v1045, %v1083
        %v1085 = vrot.slane %v1084, 2
        %v1086 = vadd.f32 %v1084, %v1085
        %v1087 = vrot.slane %v1086, 1
        %v1088 = vadd.f32 %v1086, %v1087
        %v1089 = vrot.slane %v1046, 4
        %v1090 = vadd.f32 %v1046, %v1089
        %v1091 = vrot.slane %v1090, 2
        %v1092 = vadd.f32 %v1090, %v1091
        %v1093 = vrot.slane %v1092, 1
        %v1094 = vadd.f32 %v1092, %v1093
        %vm1103 = vcmask 1041409
        %v1104 = vsel %vm1103, %v1058, %v1052
        %vm1105 = vcmask 1042434
        %v1106 = vsel %vm1105, %v1064, %v1104
        %vm1107 = vcmask 1043459
        %v1108 = vsel %vm1107, %v1070, %v1106
        %vm1109 = vcmask 1044484
        %v1110 = vsel %vm1109, %v1076, %v1108
        %vm1111 = vcmask 1045509
        %v1112 = vsel %vm1111, %v1082, %v1110
        %vm1113 = vcmask 1046534
        %v1114 = vsel %vm1113, %v1088, %v1112
        %vm1115 = vcmask 1047559
        %v1116 = vsel %vm1115, %v1094, %v1114
        %1118 = vmatprep.subr.mxu0 0.0
        %1119 = vmatpush1.msra.mxu0 %v287
        %1120 = vmatprep.subr.mxu0 0.0
        %1121 = vmatpush1.msra.mxu0 %v288
        %1122 = vmatprep.subr.mxu0 0.0
        %1123 = vmatpush1.msra.mxu0 %v289
        %1124 = vmatprep.subr.mxu0 0.0
        %1125 = vmatpush1.msra.mxu0 %v290
        %1126 = vmatprep.subr.mxu0 0.0
        %1127 = vmatpush1.msra.mxu0 %v291
        %1128 = vmatprep.subr.mxu0 0.0
        %1129 = vmatpush1.msra.mxu0 %v292
        %1130 = vmatprep.subr.mxu0 0.0
        %1131 = vmatpush1.msra.mxu0 %v293
        %1132 = vmatprep.subr.mxu0 0.0
        %1133 = vmatpush1.msra.mxu0 %v294
        %1134 = vmatprep.subr.mxu0 0.0
        %1135 = vmatpush1.msra.mxu0 %v295
        %1136 = vmatprep.subr.mxu0 0.0
        %1137 = vmatpush1.msra.mxu0 %v296
        %1138 = vmatprep.subr.mxu0 0.0
        %1139 = vmatpush1.msra.mxu0 %v297
        %1140 = vmatprep.subr.mxu0 0.0
        %1141 = vmatpush1.msra.mxu0 %v298
        %1142 = vmatprep.subr.mxu0 0.0
        %1143 = vmatpush1.msra.mxu0 %v299
        %1144 = vmatprep.subr.mxu0 0.0
        %1145 = vmatpush1.msra.mxu0 %v300
        %1146 = vmatprep.subr.mxu0 0.0
        %1147 = vmatpush1.msra.mxu0 %v301
        %1148 = vmatprep.subr.mxu0 0.0
        %1149 = vmatpush1.msra.mxu0 %v302
        %1150 = vmatprep.subr.mxu0 0.0
        %1151 = vmatpush1.msra.mxu0 0.0
        %1152 = vmatprep.subr.mxu0 0.0
        %1153 = vmatpush1.msra.mxu0 0.0
        %1154 = vmatprep.subr.mxu0 0.0
        %1155 = vmatpush1.msra.mxu0 0.0
        %1156 = vmatprep.subr.mxu0 0.0
        %1157 = vmatpush1.msra.mxu0 0.0
        %1158 = vmatprep.subr.mxu0 0.0
        %1159 = vmatpush1.msra.mxu0 0.0
        %1160 = vmatprep.subr.mxu0 0.0
        %1161 = vmatpush1.msra.mxu0 0.0
        %1162 = vmatprep.subr.mxu0 0.0
        %1163 = vmatpush1.msra.mxu0 0.0
        %1164 = vmatprep.subr.mxu0 0.0
        %1165 = vmatpush1.msra.mxu0 0.0
        %1166 = vmatprep.subr.mxu0 0.0
        %1167 = vmatpush1.msra.mxu0 0.0
        %1168 = vmatprep.subr.mxu0 0.0
        %1169 = vmatpush1.msra.mxu0 0.0
        %1170 = vmatprep.subr.mxu0 0.0
        %1171 = vmatpush1.msra.mxu0 0.0
        %1172 = vmatprep.subr.mxu0 0.0
        %1173 = vmatpush1.msra.mxu0 0.0
        %1174 = vmatprep.subr.mxu0 0.0
        %1175 = vmatpush1.msra.mxu0 0.0
        %1176 = vmatprep.subr.mxu0 0.0
        %1177 = vmatpush1.msra.mxu0 0.0
        %1178 = vmatprep.subr.mxu0 0.0
        %1179 = vmatpush1.msra.mxu0 0.0
        %1180 = vmatprep.subr.mxu0 0.0
        %1181 = vmatpush1.msra.mxu0 0.0
        %1182 = vmatprep.mubr.f32.mxu0 0.0
        %1183 = vmatmul.mubr.f32.gmra.mrb[0].mxu0 %v1116
        %v1184 = vpop.f32.mrb[0].mxu0
        %v1185 = vadd.f32 0.0, %v1184
        %v1186 = vpop.f32.mrb[0].mxu0
        %1187 = vdwg.mxu0
        %1188 = vst [vmem:[%s236] sm:$0xff] %v1185
        %s1189 = sand.u32 %s104, 1
        %s1190 = scalar_lea.sflag [#allocation4], %s1189
        %s1191 = sand.u32 %s104, 1
        %s1192 = smul.addr %s1191, 8
        %s1193 = scalar_lea.vmem [#allocation8], %s1192
        // Predicated region
        $region45: #{tpu_custom_call.1} parent=31 // pred_check
          %p1194 = pneg %p114
        $region46: #{tpu_custom_call.1} parent=31 // pred_check_branch
          %1196 = sbr.rel (%p1194) target = $region48
        $region47: #{tpu_custom_call.1} parent=31 // pred_region
          %s1198 = ssub.s32 128, 128
          %1199 = vsyncadd %s1190, %s1198
          %s1200 = smul.addr %s23, 128
          %s1201 = scalar_lea.hbm %s3, %s1200
          %s1203 = sshll.u32 %s1193, 4
          %s1204 = int_to_ptr.vmem [resolvable:$true] %s1203
          %1206 = dma.vmem_to_hbm [thread:$0]  %s1204, 128, %s1201, %s1190
        $region48: #{tpu_custom_call.1} parent=31 // pred_fallthru
          _
      $region32: #{tpu_custom_call.1} parent=5 // pred_fallthru
        _
      %p1207 = scmp.le.s32.totalorder 2, %s18
      // Predicated region
      $region49: #{tpu_custom_call.1} parent=5 // pred_check
        %p1208 = pneg %p1207
      $region50: #{tpu_custom_call.1} parent=5 // pred_check_branch
        %1210 = sbr.rel (%p1208) target = $region52
      $region51: #{tpu_custom_call.1} parent=5 // pred_region
        %s1211 = ssub.s32 %s18, 2
        // Predicated region
        $region53: #{tpu_custom_call.1} parent=51 // pred_check
          %p1212 = pneg %p120
        $region54: #{tpu_custom_call.1} parent=51 // pred_check_branch
          %1214 = sbr.rel (%p1212) target = $region56
        $region55: #{tpu_custom_call.1} parent=51 // pred_region
          %s1215 = sand.u32 %s105, 1
          %s1216 = scalar_lea.sflag [#allocation4], %s1215
          %s1217 = sand.u32 %s105, 1
          %s1218 = smul.addr %s1217, 8
          %s1219 = scalar_lea.vmem [#allocation8], %s1218
          %1220 = dma.done %s1216, 128
        $region56: #{tpu_custom_call.1} parent=51 // pred_fallthru
          _
      $region52: #{tpu_custom_call.1} parent=5 // pred_fallthru
        _
    $region6: #{tpu_custom_call.1} parent=1 // loop_footer
      %s22 = sadd.s32 1, %s18
    $region7: #{tpu_custom_call.1} parent=1 // loop_footer_branch
      %17 = sbr.rel target = $region3
    $region8: #{tpu_custom_call.1} parent=1 // loop_exit
      _
    %1221 = vsyncpa [#allocation3], 1
    %s1222 = scalar_lea.sflag [#allocation3], 1
    %1223 = vsyncpa %s1222, 1
    %1224 = vsyncpa [#allocation6], 1
    %s1225 = scalar_lea.sflag [#allocation6], 1
    %1226 = vsyncpa %s1225, 1
    %1227 = vsyncpa [#allocation4], 1
    %s1228 = scalar_lea.sflag [#allocation4], 1
    %1229 = vsyncpa %s1228, 1

</llo_original>
